<compile_context>
chip_gen: v6e
topology: v6e:2x2x1
jax: 0.10.0
libtpu: 0.0.40
codegen_flags: <defaults>
</compile_context>

<pallas_src>
import functools
import math

import jax
import jax.numpy as jnp
from jax.experimental import pallas as pl
from jax.experimental.pallas import tpu as pltpu


def _gc_block_kernel(x_ref, w_ref, att_ref, bn_ref, o_ref, *,
                     batch, f_in, f_out, mxu_dtype):
    """Fused GraphConv->BN->LeakyReLU (x2), eval mode.

    Lane-packed layouts (column index = b*F + f), no in-kernel relayouts:
      x_ref   : (N, B*Fin)              f32
      w_ref   : (Fin, Fin+Fout)         mxu_dtype   [:, :Fin]=W1, [:, Fin:]=W2
      att_ref : (2, N, N)               mxu_dtype
      bn_ref  : (2, N, B*(Fin+Fout))    f32         [0]=scale, [1]=shift (bias folded)
      o_ref   : (N, B*Fout)             f32
    """
    neg_slope = jnp.float32(0.01)

    def layer(y, w, att, col_lo, fo):
        fi = w.shape[0]
        # Per-batch W matmul on static lane slices (B is tiny & static).
        xw = jnp.concatenate(
            [jnp.dot(y[:, b * fi:(b + 1) * fi].astype(mxu_dtype), w,
                     preferred_element_type=jnp.float32)
             for b in range(batch)],
            axis=1)                                          # (N, B*fo) f32
        # One packed MXU push for the graph (att) matmul over all batches.
        z = jnp.dot(att, xw.astype(mxu_dtype),
                    preferred_element_type=jnp.float32)      # (N, B*fo) f32
        # Folded eval-mode BatchNorm (+ folded GC bias), then LeakyReLU; all f32.
        z = (z * bn_ref[0, :, col_lo:col_lo + batch * fo]
               + bn_ref[1, :, col_lo:col_lo + batch * fo])
        return jnp.where(z >= 0, z, neg_slope * z)           # dropout = identity (eval)

    h = layer(x_ref[...], w_ref[:, :f_in], att_ref[0], 0, f_in)
    g = layer(h, w_ref[:, f_in:f_in + f_out], att_ref[1], batch * f_in, f_out)
    o_ref[...] = g.astype(o_ref.dtype)


def gc_block_nores(x, params):
    """x: (B, N, Fin) float32.  params: packed/folded parameters (see fold_params)."""
    B, N, Fin = x.shape
    Fout = params["w"].shape[1] - Fin
    assert params["att"].shape == (2, N, N)
    assert params["bn"].shape == (2, N, B * (Fin + Fout)), \
        "params were folded for a different batch size / feature widths"

    # Pack the batch into lanes once, outside the kernel (plain XLA ops).
    x_packed = jnp.transpose(x, (1, 0, 2)).reshape(N, B * Fin)

    flops = 2 * B * N * (Fin * Fin + N * Fin + Fin * Fout + N * Fout)
    bytes_accessed = (
        x_packed.size * x_packed.dtype.itemsize
        + params["w"].size * params["w"].dtype.itemsize
        + params["att"].size * params["att"].dtype.itemsize
        + params["bn"].size * params["bn"].dtype.itemsize
        + N * B * Fout * 4)

    vmem = pl.BlockSpec(memory_space=pltpu.MemorySpace.VMEM)  # whole array resident
    kernel = functools.partial(_gc_block_kernel, batch=B, f_in=Fin, f_out=Fout,
                               mxu_dtype=params["w"].dtype)

    out_packed = pl.pallas_call(
        kernel,
        out_shape=jax.ShapeDtypeStruct((N, B * Fout), jnp.float32),
        in_specs=[vmem] * 4,
        out_specs=vmem,
        cost_estimate=pl.CostEstimate(flops=flops, transcendentals=0,
                                      bytes_accessed=bytes_accessed),
    )(x_packed, params["w"], params["att"], params["bn"])

    # Un-pack lanes back to (B, N, Fout) in XLA.
    return jnp.transpose(out_packed.reshape(N, B, Fout), (1, 0, 2))


# ----------------------------- parameters -----------------------------------


def make_raw_params(key, node_n, in_features, out_features):
    """PyTorch-style init (GraphConvolution uniform, BatchNorm1d running stats)."""
    keys = jax.random.split(key, 14)

    def uniform(k, shape, stdv):
        return jax.random.uniform(k, shape, jnp.float32, -stdv, stdv)

    stdv1 = 1.0 / math.sqrt(in_features)
    stdv2 = 1.0 / math.sqrt(out_features)
    nf1 = node_n * in_features
    nf2 = node_n * out_features
    return dict(
        w1=uniform(keys[0], (in_features, in_features), stdv1),
        att1=uniform(keys[1], (node_n, node_n), stdv1),
        b1=uniform(keys[2], (in_features,), stdv1),
        w2=uniform(keys[3], (in_features, out_features), stdv2),
        att2=uniform(keys[4], (node_n, node_n), stdv2),
        b2=uniform(keys[5], (out_features,), stdv2),
        g1=1.0 + 0.1 * jax.random.normal(keys[6], (nf1,), jnp.float32),
        be1=0.1 * jax.random.normal(keys[7], (nf1,), jnp.float32),
        m1=0.1 * jax.random.normal(keys[8], (nf1,), jnp.float32),
        v1=1.0 + 0.1 * jax.random.uniform(keys[9], (nf1,), jnp.float32),
        g2=1.0 + 0.1 * jax.random.normal(keys[10], (nf2,), jnp.float32),
        be2=0.1 * jax.random.normal(keys[11], (nf2,), jnp.float32),
        m2=0.1 * jax.random.normal(keys[12], (nf2,), jnp.float32),
        v2=1.0 + 0.1 * jax.random.uniform(keys[13], (nf2,), jnp.float32),
    )


def fold_params(rp, node_n, in_features, out_features, batch, eps=1e-5,
                mxu_dtype=jnp.bfloat16):
    """Pack/fold parameters for the fused kernel.

    - Eval-mode BN (over flattened N*F) and the GC bias are folded exactly:
          bn(att@xW + b) = s*(att@xW) + (s*b + t)
    - scale/shift pre-tiled over batch to the kernel's (N, B*F) lane layout.
    - W1|W2 concatenated along lanes, att1/att2 stacked; both pre-cast to
      mxu_dtype (MXU operands).  BN math / accumulation stay f32 in-kernel.
    """
    def fold(gamma, beta, mean, var, bias, f):
        inv = gamma / jnp.sqrt(var + eps)
        scale = inv.reshape(node_n, f)
        shift = (beta - mean * inv).reshape(node_n, f) + scale * bias[None, :]
        return jnp.tile(scale, (1, batch)), jnp.tile(shift, (1, batch))

    s1, t1 = fold(rp["g1"], rp["be1"], rp["m1"], rp["v1"], rp["b1"], in_features)
    s2, t2 = fold(rp["g2"], rp["be2"], rp["m2"], rp["v2"], rp["b2"], out_features)
    bn = jnp.stack([jnp.concatenate([s1, s2], axis=1),
                    jnp.concatenate([t1, t2], axis=1)]).astype(jnp.float32)

    return dict(
        w=jnp.concatenate([rp["w1"], rp["w2"]], axis=1).astype(mxu_dtype),
        att=jnp.stack([rp["att1"], rp["att2"]]).astype(mxu_dtype),
        bn=bn,
    )


# ------------------------------ reference ------------------------------------


def reference(x, rp, eps=1e-5, mxu_dtype=jnp.float32):
    """Pure-JAX eval-mode forward from the RAW params.

    With mxu_dtype=bf16 it emulates the kernel's MXU-operand rounding (bf16
    operands incl. the xw intermediate, f32 accumulation) so the bf16 path can
    be checked against a matching reference rather than a loose f32 tolerance.
    """
    def gc(a, w, att, b):
        xw = jnp.einsum("bnf,fg->bng", a.astype(mxu_dtype), w.astype(mxu_dtype),
                        preferred_element_type=jnp.float32)
        y = jnp.einsum("nm,bmf->bnf", att.astype(mxu_dtype), xw.astype(mxu_dtype),
                       preferred_element_type=jnp.float32)
        return y + b

    def bn(y, gamma, beta, mean, var):
        b_, n, f = y.shape
        yf = y.reshape(b_, n * f)
        yf = (yf - mean) / jnp.sqrt(var + eps) * gamma + beta
        return yf.reshape(b_, n, f)

    def leaky(v):
        return jnp.where(v >= 0, v, 0.01 * v)

    y = leaky(bn(gc(x, rp["w1"], rp["att1"], rp["b1"]),
                 rp["g1"], rp["be1"], rp["m1"], rp["v1"]))
    y = leaky(bn(gc(y, rp["w2"], rp["att2"], rp["b2"]),
                 rp["g2"], rp["be2"], rp["m2"], rp["v2"]))
    return y


if __name__ == "__main__":
    B, NODE_N, F_IN, F_OUT = 2, 48, 16, 16
    key = jax.random.PRNGKey(0)
    kx, kp = jax.random.split(key)

    x = jax.random.normal(kx, (B, NODE_N, F_IN), jnp.float32)
    raw = make_raw_params(kp, NODE_N, F_IN, F_OUT)

    fwd = jax.jit(gc_block_nores)

    # f32 MXU operands: faithful to the PyTorch module's math.
    p_f32 = fold_params(raw, NODE_N, F_IN, F_OUT, batch=B, mxu_dtype=jnp.float32)
    out_f32 = jax.block_until_ready(fwd(x, p_f32))
    ref_f32 = reference(x, raw)
    assert out_f32.shape == (B, NODE_N, F_OUT)
    assert jnp.allclose(out_f32, ref_f32, atol=5e-4, rtol=5e-4), "f32 kernel mismatch"

    # bf16 MXU operands (default on all TPU generations; elementwise math stays f32),
    # checked against a bf16-emulated reference so real drift is not hidden.
    p_bf16 = fold_params(raw, NODE_N, F_IN, F_OUT, batch=B)       # bf16 default
    out_bf16 = jax.block_until_ready(fwd(x, p_bf16))
    ref_bf16 = reference(x, raw, mxu_dtype=jnp.bfloat16)
    assert jnp.allclose(out_bf16, ref_bf16, atol=3e-2, rtol=3e-2), \
        "bf16 kernel mismatch vs bf16-emulated reference"
    assert jnp.allclose(out_bf16, ref_f32, atol=2e-1, rtol=2e-1), \
        "bf16 kernel drifted too far from the f32 reference"

    print("KERNEL_OK")
</pallas_src>

<mosaic_0001>
module attributes {stable_mosaic.version = 11 : i64} {
  func.func @_gc_block_kernel(%arg0: memref<48x32xf32, #tpu.memory_space<vmem>>, %arg1: memref<16x32xf32, #tpu.memory_space<vmem>>, %arg2: memref<2x48x48xf32, #tpu.memory_space<vmem>>, %arg3: memref<2x48x64xf32, #tpu.memory_space<vmem>>, %arg4: memref<48x32xf32, #tpu.memory_space<vmem>>) attributes {dimension_semantics = [], scalar_prefetch = 0 : i64, scratch_operands = 0 : i64, tpu.core_type = #tpu.core_type<tc>} {
    %c0 = arith.constant 0 : index
    %c0_0 = arith.constant 0 : index
    %0 = vector.load %arg0[%c0, %c0_0] : memref<48x32xf32, #tpu.memory_space<vmem>>, vector<48x32xf32>
    %c0_1 = arith.constant 0 : index
    %c0_2 = arith.constant 0 : index
    %1 = vector.load %arg1[%c0_1, %c0_2] : memref<16x32xf32, #tpu.memory_space<vmem>>, vector<16x16xf32>
    %c0_3 = arith.constant 0 : index
    %c0_4 = arith.constant 0 : index
    %c0_5 = arith.constant 0 : index
    %2 = vector.load %arg2[%c0_3, %c0_4, %c0_5] : memref<2x48x48xf32, #tpu.memory_space<vmem>>, vector<1x48x48xf32>
    %3 = vector.shape_cast %2 : vector<1x48x48xf32> to vector<48x48xf32>
    %4 = vector.extract_strided_slice %0 {offsets = [0, 0], sizes = [48, 16], strides = [1, 1]} : vector<48x32xf32> to vector<48x16xf32>
    %cst = arith.constant dense<0.000000e+00> : vector<48x16xf32>
    %5 = tpu.matmul %4, %1, %cst {dimension_numbers = #tpu.dot_dimension_numbers<[1], [0], [0], [1], [0, 0, 1, 1], [], []>} : vector<48x16xf32>, vector<16x16xf32>, vector<48x16xf32> -> vector<48x16xf32>
    %6 = vector.extract_strided_slice %0 {offsets = [0, 16], sizes = [48, 16], strides = [1, 1]} : vector<48x32xf32> to vector<48x16xf32>
    %cst_6 = arith.constant dense<0.000000e+00> : vector<48x16xf32>
    %7 = tpu.matmul %6, %1, %cst_6 {dimension_numbers = #tpu.dot_dimension_numbers<[1], [0], [0], [1], [0, 0, 1, 1], [], []>} : vector<48x16xf32>, vector<16x16xf32>, vector<48x16xf32> -> vector<48x16xf32>
    %8 = tpu.concatenate %5, %7 in 1 : vector<48x16xf32>, vector<48x16xf32> -> vector<48x32xf32>
    %cst_7 = arith.constant dense<0.000000e+00> : vector<48x32xf32>
    %9 = tpu.matmul %3, %8, %cst_7 {dimension_numbers = #tpu.dot_dimension_numbers<[1], [0], [0], [1], [0, 0, 1, 1], [], []>} : vector<48x48xf32>, vector<48x32xf32>, vector<48x32xf32> -> vector<48x32xf32>
    %c0_8 = arith.constant 0 : index
    %c0_9 = arith.constant 0 : index
    %c0_10 = arith.constant 0 : index
    %10 = vector.load %arg3[%c0_8, %c0_9, %c0_10] : memref<2x48x64xf32, #tpu.memory_space<vmem>>, vector<1x48x32xf32>
    %11 = vector.shape_cast %10 : vector<1x48x32xf32> to vector<48x32xf32>
    %12 = arith.mulf %9, %11 : vector<48x32xf32>
    %c1 = arith.constant 1 : index
    %c0_11 = arith.constant 0 : index
    %c0_12 = arith.constant 0 : index
    %13 = vector.load %arg3[%c1, %c0_11, %c0_12] : memref<2x48x64xf32, #tpu.memory_space<vmem>>, vector<1x48x32xf32>
    %14 = vector.shape_cast %13 : vector<1x48x32xf32> to vector<48x32xf32>
    %15 = arith.addf %12, %14 : vector<48x32xf32>
    %cst_13 = arith.constant 0.000000e+00 : f32
    %16 = vector.broadcast %cst_13 : f32 to vector<48x32xf32>
    %17 = arith.cmpf oge, %15, %16 : vector<48x32xf32>
    %cst_14 = arith.constant 0.00999999977 : f32
    %18 = vector.broadcast %cst_14 : f32 to vector<48x32xf32>
    %19 = arith.mulf %18, %15 : vector<48x32xf32>
    %20 = arith.select %17, %15, %19 : vector<48x32xi1>, vector<48x32xf32>
    %c0_15 = arith.constant 0 : index
    %c16 = arith.constant 16 : index
    %21 = vector.load %arg1[%c0_15, %c16] : memref<16x32xf32, #tpu.memory_space<vmem>>, vector<16x16xf32>
    %c1_16 = arith.constant 1 : index
    %c0_17 = arith.constant 0 : index
    %c0_18 = arith.constant 0 : index
    %22 = vector.load %arg2[%c1_16, %c0_17, %c0_18] : memref<2x48x48xf32, #tpu.memory_space<vmem>>, vector<1x48x48xf32>
    %23 = vector.shape_cast %22 : vector<1x48x48xf32> to vector<48x48xf32>
    %24 = vector.extract_strided_slice %20 {offsets = [0, 0], sizes = [48, 16], strides = [1, 1]} : vector<48x32xf32> to vector<48x16xf32>
    %cst_19 = arith.constant dense<0.000000e+00> : vector<48x16xf32>
    %25 = tpu.matmul %24, %21, %cst_19 {dimension_numbers = #tpu.dot_dimension_numbers<[1], [0], [0], [1], [0, 0, 1, 1], [], []>} : vector<48x16xf32>, vector<16x16xf32>, vector<48x16xf32> -> vector<48x16xf32>
    %26 = vector.extract_strided_slice %20 {offsets = [0, 16], sizes = [48, 16], strides = [1, 1]} : vector<48x32xf32> to vector<48x16xf32>
    %cst_20 = arith.constant dense<0.000000e+00> : vector<48x16xf32>
    %27 = tpu.matmul %26, %21, %cst_20 {dimension_numbers = #tpu.dot_dimension_numbers<[1], [0], [0], [1], [0, 0, 1, 1], [], []>} : vector<48x16xf32>, vector<16x16xf32>, vector<48x16xf32> -> vector<48x16xf32>
    %28 = tpu.concatenate %25, %27 in 1 : vector<48x16xf32>, vector<48x16xf32> -> vector<48x32xf32>
    %cst_21 = arith.constant dense<0.000000e+00> : vector<48x32xf32>
    %29 = tpu.matmul %23, %28, %cst_21 {dimension_numbers = #tpu.dot_dimension_numbers<[1], [0], [0], [1], [0, 0, 1, 1], [], []>} : vector<48x48xf32>, vector<48x32xf32>, vector<48x32xf32> -> vector<48x32xf32>
    %c0_22 = arith.constant 0 : index
    %c0_23 = arith.constant 0 : index
    %c32 = arith.constant 32 : index
    %30 = vector.load %arg3[%c0_22, %c0_23, %c32] : memref<2x48x64xf32, #tpu.memory_space<vmem>>, vector<1x48x32xf32>
    %31 = vector.shape_cast %30 : vector<1x48x32xf32> to vector<48x32xf32>
    %32 = arith.mulf %29, %31 : vector<48x32xf32>
    %c1_24 = arith.constant 1 : index
    %c0_25 = arith.constant 0 : index
    %c32_26 = arith.constant 32 : index
    %33 = vector.load %arg3[%c1_24, %c0_25, %c32_26] : memref<2x48x64xf32, #tpu.memory_space<vmem>>, vector<1x48x32xf32>
    %34 = vector.shape_cast %33 : vector<1x48x32xf32> to vector<48x32xf32>
    %35 = arith.addf %32, %34 : vector<48x32xf32>
    %cst_27 = arith.constant 0.000000e+00 : f32
    %36 = vector.broadcast %cst_27 : f32 to vector<48x32xf32>
    %37 = arith.cmpf oge, %35, %36 : vector<48x32xf32>
    %cst_28 = arith.constant 0.00999999977 : f32
    %38 = vector.broadcast %cst_28 : f32 to vector<48x32xf32>
    %39 = arith.mulf %38, %35 : vector<48x32xf32>
    %40 = arith.select %37, %35, %39 : vector<48x32xi1>, vector<48x32xf32>
    %c0_29 = arith.constant 0 : index
    %c0_30 = arith.constant 0 : index
    %41 = vector.load %arg4[%c0_29, %c0_30] : memref<48x32xf32, #tpu.memory_space<vmem>>, vector<48x32xf32>
    tpu.vector_store %arg4[%c0_29, %c0_30], %40 {strides = array<i32>} : memref<48x32xf32, #tpu.memory_space<vmem>>, vector<48x32xf32>,
    return
  }
}

</mosaic_0001>

<llo_original>
// kernel: gc_block_nores.1
$region0: #{gc_block_nores.1}
  #allocation0 [shape = 'u32[]', space=smem, size = 0x4, offset = 0x4, fixed_abs, tag = 'smem constant byte address 0x4 - core index']
  #allocation1 [shape = 'u32[144,128]{1,0:T(1,128)}', space=vmem, size = 0x12000, scoped, tag = 'internal scratch']
  %s0 = inlined_call_operand.vmem [shape: f32[48,32], index: 0, kind: input, shape index: {}]
  %s1 = inlined_call_operand.vmem [shape: f32[16,32], index: 1, kind: input, shape index: {}]
  %s2 = inlined_call_operand.hbm [shape: f32[2,48,48], index: 2, kind: input, shape index: {}]
  %s3 = inlined_call_operand.hbm [shape: f32[2,48,64], index: 3, kind: input, shape index: {}]
  %s4 = inlined_call_operand.vmem [shape: f32[48,32], index: 4, kind: output, shape index: {}]
  %s5 = sld [smem:[#allocation0]]
  $region34: #{gc_block_nores.1} parent=0
    _
  %s7 = ssub.s32 1, %s5
  %s8 = scalar_select 0, %s7, %s5
  $region1: #{gc_block_nores.1} parent=0
    #allocation2 [shape = 'u8[49152]{0}', space=vmem, size = 0xc000, scoped, tag = 'input window, operand 2, single buffered']
    #allocation3 [shape = 's32[1]{0}', space=sflag, size = 0x4, scoped, tag = 'scoped memory for gc_block_nores.1']
    #allocation4 [shape = 'u8[49152]{0}', space=vmem, size = 0xc000, scoped, tag = 'input window, operand 3, single buffered']
    #allocation5 [shape = 's32[1]{0}', space=sflag, size = 0x4, scoped, tag = 'scoped memory for gc_block_nores.1']
    %9 = vsyncpa [#allocation3], 0
    %10 = vsyncpa [#allocation5], 0
    // Predicated region
    $region2: #{gc_block_nores.1} parent=1 // pred_check
      _
    $region3: #{gc_block_nores.1} parent=1 // pred_check_branch
      %12 = sbr.rel (0) target = $region5
    $region4: #{gc_block_nores.1} parent=1 // pred_region
      _
    $region5: #{gc_block_nores.1} parent=1 // pred_fallthru
      _
    // Predicated region
    $region6: #{gc_block_nores.1} parent=1 // pred_check
      _
    $region7: #{gc_block_nores.1} parent=1 // pred_check_branch
      %14 = sbr.rel (0) target = $region9
    $region8: #{gc_block_nores.1} parent=1 // pred_region
      _
    $region9: #{gc_block_nores.1} parent=1 // pred_fallthru
      _
    // Predicated region
    $region10: #{gc_block_nores.1} parent=1 // pred_check
      _
    $region11: #{gc_block_nores.1} parent=1 // pred_check_branch
      %16 = sbr.rel (0) target = $region13
    $region12: #{gc_block_nores.1} parent=1 // pred_region
      %s18 = ssub.s32 1536, 1536
      %19 = vsyncadd [#allocation3], %s18
      %s20 = sshll.u32 [#allocation2], 4
      %s21 = int_to_ptr.vmem [resolvable:$true] %s20
      %26 = dma.hbm_to_vmem [thread:$0]  %s2, 1536, %s21, [#allocation3], 128, 128, 8
    $region13: #{gc_block_nores.1} parent=1 // pred_fallthru
      _
    // Predicated region
    $region14: #{gc_block_nores.1} parent=1 // pred_check
      _
    $region15: #{gc_block_nores.1} parent=1 // pred_check_branch
      %28 = sbr.rel (0) target = $region17
    $region16: #{gc_block_nores.1} parent=1 // pred_region
      %s30 = ssub.s32 1536, 1536
      %31 = vsyncadd [#allocation5], %s30
      %s32 = sshll.u32 [#allocation4], 4
      %s33 = int_to_ptr.vmem [resolvable:$true] %s32
      %38 = dma.hbm_to_vmem [thread:$0]  %s3, 1536, %s33, [#allocation5], 128, 128, 8
    $region17: #{gc_block_nores.1} parent=1 // pred_fallthru
      _
    // Predicated region
    $region18: #{gc_block_nores.1} parent=1 // pred_check
      _
    $region19: #{gc_block_nores.1} parent=1 // pred_check_branch
      %40 = sbr.rel (0) target = $region21
    $region20: #{gc_block_nores.1} parent=1 // pred_region
      %41 = dma.done [#allocation3], 1536
    $region21: #{gc_block_nores.1} parent=1 // pred_fallthru
      _
    // Predicated region
    $region22: #{gc_block_nores.1} parent=1 // pred_check
      _
    $region23: #{gc_block_nores.1} parent=1 // pred_check_branch
      %43 = sbr.rel (0) target = $region25
    $region24: #{gc_block_nores.1} parent=1 // pred_region
      %44 = dma.done [#allocation5], 1536
    $region25: #{gc_block_nores.1} parent=1 // pred_fallthru
      _
    %v45 = vld [vmem:[%s0] sm:$0xff]
    %v46 = vld [vmem:[%s0 + $0x8] sm:$0xff]
    %v47 = vld [vmem:[%s0 + $0x10] sm:$0xff]
    %v48 = vld [vmem:[%s0 + $0x18] sm:$0xff]
    %v49 = vld [vmem:[%s0 + $0x20] sm:$0xff]
    %v50 = vld [vmem:[%s0 + $0x28] sm:$0xff]
    %v51 = vld [vmem:[%s1] sm:$0xff]
    %v52 = vld [vmem:[%s1 + $0x8] sm:$0xff]
    %v53 = vld [vmem:[#allocation2] sm:$0xff]
    %v54 = vld [vmem:[#allocation2 + $0x8] sm:$0xff]
    %v55 = vld [vmem:[#allocation2 + $0x10] sm:$0xff]
    %v56 = vld [vmem:[#allocation2 + $0x18] sm:$0xff]
    %v57 = vld [vmem:[#allocation2 + $0x20] sm:$0xff]
    %v58 = vld [vmem:[#allocation2 + $0x28] sm:$0xff]
    %vm59 = vcmask 130048
    %v61 = vsel %vm59, %v45, 0
    %v64 = vsel %vm59, %v46, 0
    %v67 = vsel %vm59, %v47, 0
    %v70 = vsel %vm59, %v48, 0
    %v73 = vsel %vm59, %v49, 0
    %v76 = vsel %vm59, %v50, 0
    %78 = vmatprep.subr.mxu0 0.0
    %79 = vmatpush1.msra.mxu0 0.0
    %80 = vmatprep.subr.mxu0 0.0
    %81 = vmatpush1.msra.mxu0 0.0
    %82 = vmatprep.subr.mxu0 0.0
    %83 = vmatpush1.msra.mxu0 0.0
    %84 = vmatprep.subr.mxu0 0.0
    %85 = vmatpush1.msra.mxu0 0.0
    %86 = vmatprep.subr.mxu0 0.0
    %87 = vmatpush1.msra.mxu0 0.0
    %88 = vmatprep.subr.mxu0 0.0
    %89 = vmatpush1.msra.mxu0 0.0
    %90 = vmatprep.subr.mxu0 0.0
    %91 = vmatpush1.msra.mxu0 0.0
    %92 = vmatprep.subr.mxu0 0.0
    %93 = vmatpush1.msra.mxu0 0.0
    %94 = vmatprep.subr.mxu0 0.0
    %95 = vmatpush1.msra.mxu0 0.0
    %96 = vmatprep.subr.mxu0 0.0
    %97 = vmatpush1.msra.mxu0 0.0
    %98 = vmatprep.subr.mxu0 0.0
    %99 = vmatpush1.msra.mxu0 0.0
    %100 = vmatprep.subr.mxu0 0.0
    %101 = vmatpush1.msra.mxu0 0.0
    %102 = vmatprep.subr.mxu0 0.0
    %103 = vmatpush1.msra.mxu0 0.0
    %104 = vmatprep.subr.mxu0 0.0
    %105 = vmatpush1.msra.mxu0 0.0
    %106 = vmatprep.subr.mxu0 0.0
    %107 = vmatpush1.msra.mxu0 %v52
    %108 = vmatprep.subr.mxu0 0.0
    %109 = vmatpush1.msra.mxu0 %v51
    %110 = vmatprep.subr.mxu0 0.0
    %111 = vmatpush2.msra.mxu0 0.0
    %112 = vmatprep.subr.mxu0 0.0
    %113 = vmatpush2.msra.mxu0 0.0
    %114 = vmatprep.subr.mxu0 0.0
    %115 = vmatpush2.msra.mxu0 0.0
    %116 = vmatprep.subr.mxu0 0.0
    %117 = vmatpush2.msra.mxu0 0.0
    %118 = vmatprep.subr.mxu0 0.0
    %119 = vmatpush2.msra.mxu0 0.0
    %120 = vmatprep.subr.mxu0 0.0
    %121 = vmatpush2.msra.mxu0 0.0
    %122 = vmatprep.subr.mxu0 0.0
    %123 = vmatpush2.msra.mxu0 0.0
    %124 = vmatprep.subr.mxu0 0.0
    %125 = vmatpush2.msra.mxu0 0.0
    %126 = vmatprep.subr.mxu0 0.0
    %127 = vmatpush2.msra.mxu0 0.0
    %128 = vmatprep.subr.mxu0 0.0
    %129 = vmatpush2.msra.mxu0 0.0
    %130 = vmatprep.subr.mxu0 0.0
    %131 = vmatpush2.msra.mxu0 0.0
    %132 = vmatprep.subr.mxu0 0.0
    %133 = vmatpush2.msra.mxu0 0.0
    %134 = vmatprep.subr.mxu0 0.0
    %135 = vmatpush2.msra.mxu0 0.0
    %136 = vmatprep.subr.mxu0 0.0
    %137 = vmatpush2.msra.mxu0 0.0
    %138 = vmatprep.subr.mxu0 0.0
    %139 = vmatpush2.msra.mxu0 0.0
    %140 = vmatprep.subr.mxu0 0.0
    %141 = vmatpush2.msra.mxu0 0.0
    %142 = vmatprep.mubr.f32.mxu0 0.0
    %143 = vmatmul.mubr.f32.gmra.mxu0 %v61
    %v144 = vpop.f32.mrf.mxu0
    %v145 = vadd.f32 0.0, %v144
    %v146 = vpop.f32.mrf.mxu0
    %147 = vmatprep.mubr.f32.mxu0 0.0
    %148 = vmatmul.mubr.f32.gmra.mxu0 %v64
    %v149 = vpop.f32.mrf.mxu0
    %v150 = vadd.f32 0.0, %v149
    %v151 = vpop.f32.mrf.mxu0
    %152 = vmatprep.mubr.f32.mxu0 0.0
    %153 = vmatmul.mubr.f32.gmra.mxu0 %v67
    %v154 = vpop.f32.mrf.mxu0
    %v155 = vadd.f32 0.0, %v154
    %v156 = vpop.f32.mrf.mxu0
    %157 = vmatprep.mubr.f32.mxu0 0.0
    %158 = vmatmul.mubr.f32.gmra.mxu0 %v70
    %v159 = vpop.f32.mrf.mxu0
    %v160 = vadd.f32 0.0, %v159
    %v161 = vpop.f32.mrf.mxu0
    %162 = vmatprep.mubr.f32.mxu0 0.0
    %163 = vmatmul.mubr.f32.gmra.mxu0 %v73
    %v164 = vpop.f32.mrf.mxu0
    %v165 = vadd.f32 0.0, %v164
    %v166 = vpop.f32.mrf.mxu0
    %167 = vmatprep.mubr.f32.mxu0 0.0
    %168 = vmatmul.mubr.f32.gmra.mxu0 %v76
    %v169 = vpop.f32.mrf.mxu0
    %v170 = vadd.f32 0.0, %v169
    %v171 = vpop.f32.mrf.mxu0
    %172 = vdwg.mxu0
    %173 = vrot.lane.b32.xlu0 %v45, 112
    %v174 = vpop.permute.xlu0 %173
    %175 = vrot.lane.b32.xlu0 %v46, 112
    %v176 = vpop.permute.xlu0 %175
    %177 = vrot.lane.b32.xlu0 %v47, 112
    %v178 = vpop.permute.xlu0 %177
    %179 = vrot.lane.b32.xlu0 %v48, 112
    %v180 = vpop.permute.xlu0 %179
    %181 = vrot.lane.b32.xlu0 %v49, 112
    %v182 = vpop.permute.xlu0 %181
    %183 = vrot.lane.b32.xlu0 %v50, 112
    %v184 = vpop.permute.xlu0 %183
    %v185 = vsel %vm59, %v174, 0
    %v187 = vsel %vm59, %v176, 0
    %v189 = vsel %vm59, %v178, 0
    %v191 = vsel %vm59, %v180, 0
    %v193 = vsel %vm59, %v182, 0
    %v195 = vsel %vm59, %v184, 0
    %197 = vmatprep.subr.mxu0 0.0
    %198 = vmatpush1.msra.mxu0 0.0
    %199 = vmatprep.subr.mxu0 0.0
    %200 = vmatpush1.msra.mxu0 0.0
    %201 = vmatprep.subr.mxu0 0.0
    %202 = vmatpush1.msra.mxu0 0.0
    %203 = vmatprep.subr.mxu0 0.0
    %204 = vmatpush1.msra.mxu0 0.0
    %205 = vmatprep.subr.mxu0 0.0
    %206 = vmatpush1.msra.mxu0 0.0
    %207 = vmatprep.subr.mxu0 0.0
    %208 = vmatpush1.msra.mxu0 0.0
    %209 = vmatprep.subr.mxu0 0.0
    %210 = vmatpush1.msra.mxu0 0.0
    %211 = vmatprep.subr.mxu0 0.0
    %212 = vmatpush1.msra.mxu0 0.0
    %213 = vmatprep.subr.mxu0 0.0
    %214 = vmatpush1.msra.mxu0 0.0
    %215 = vmatprep.subr.mxu0 0.0
    %216 = vmatpush1.msra.mxu0 0.0
    %217 = vmatprep.subr.mxu0 0.0
    %218 = vmatpush1.msra.mxu0 0.0
    %219 = vmatprep.subr.mxu0 0.0
    %220 = vmatpush1.msra.mxu0 0.0
    %221 = vmatprep.subr.mxu0 0.0
    %222 = vmatpush1.msra.mxu0 0.0
    %223 = vmatprep.subr.mxu0 0.0
    %224 = vmatpush1.msra.mxu0 0.0
    %225 = vmatprep.subr.mxu0 0.0
    %226 = vmatpush1.msra.mxu0 %v52
    %227 = vmatprep.subr.mxu0 0.0
    %228 = vmatpush1.msra.mxu0 %v51
    %229 = vmatprep.subr.mxu0 0.0
    %230 = vmatpush2.msra.mxu0 0.0
    %231 = vmatprep.subr.mxu0 0.0
    %232 = vmatpush2.msra.mxu0 0.0
    %233 = vmatprep.subr.mxu0 0.0
    %234 = vmatpush2.msra.mxu0 0.0
    %235 = vmatprep.subr.mxu0 0.0
    %236 = vmatpush2.msra.mxu0 0.0
    %237 = vmatprep.subr.mxu0 0.0
    %238 = vmatpush2.msra.mxu0 0.0
    %239 = vmatprep.subr.mxu0 0.0
    %240 = vmatpush2.msra.mxu0 0.0
    %241 = vmatprep.subr.mxu0 0.0
    %242 = vmatpush2.msra.mxu0 0.0
    %243 = vmatprep.subr.mxu0 0.0
    %244 = vmatpush2.msra.mxu0 0.0
    %245 = vmatprep.subr.mxu0 0.0
    %246 = vmatpush2.msra.mxu0 0.0
    %247 = vmatprep.subr.mxu0 0.0
    %248 = vmatpush2.msra.mxu0 0.0
    %249 = vmatprep.subr.mxu0 0.0
    %250 = vmatpush2.msra.mxu0 0.0
    %251 = vmatprep.subr.mxu0 0.0
    %252 = vmatpush2.msra.mxu0 0.0
    %253 = vmatprep.subr.mxu0 0.0
    %254 = vmatpush2.msra.mxu0 0.0
    %255 = vmatprep.subr.mxu0 0.0
    %256 = vmatpush2.msra.mxu0 0.0
    %257 = vmatprep.subr.mxu0 0.0
    %258 = vmatpush2.msra.mxu0 0.0
    %259 = vmatprep.subr.mxu0 0.0
    %260 = vmatpush2.msra.mxu0 0.0
    %261 = vmatprep.mubr.f32.mxu0 0.0
    %262 = vmatmul.mubr.f32.gmra.mxu0 %v185
    %v263 = vpop.f32.mrf.mxu0
    %v264 = vadd.f32 0.0, %v263
    %v265 = vpop.f32.mrf.mxu0
    %266 = vmatprep.mubr.f32.mxu0 0.0
    %267 = vmatmul.mubr.f32.gmra.mxu0 %v187
    %v268 = vpop.f32.mrf.mxu0
    %v269 = vadd.f32 0.0, %v268
    %v270 = vpop.f32.mrf.mxu0
    %271 = vmatprep.mubr.f32.mxu0 0.0
    %272 = vmatmul.mubr.f32.gmra.mxu0 %v189
    %v273 = vpop.f32.mrf.mxu0
    %v274 = vadd.f32 0.0, %v273
    %v275 = vpop.f32.mrf.mxu0
    %276 = vmatprep.mubr.f32.mxu0 0.0
    %277 = vmatmul.mubr.f32.gmra.mxu0 %v191
    %v278 = vpop.f32.mrf.mxu0
    %v279 = vadd.f32 0.0, %v278
    %v280 = vpop.f32.mrf.mxu0
    %281 = vmatprep.mubr.f32.mxu0 0.0
    %282 = vmatmul.mubr.f32.gmra.mxu0 %v193
    %v283 = vpop.f32.mrf.mxu0
    %v284 = vadd.f32 0.0, %v283
    %v285 = vpop.f32.mrf.mxu0
    %286 = vmatprep.mubr.f32.mxu0 0.0
    %287 = vmatmul.mubr.f32.gmra.mxu0 %v195
    %v288 = vpop.f32.mrf.mxu0
    %v289 = vadd.f32 0.0, %v288
    %v290 = vpop.f32.mrf.mxu0
    %291 = vdwg.mxu0
    %298 = vrot.lane.b32.xlu0 %v264, 16
    %v299 = vpop.permute.xlu0 %298
    %300 = vrot.lane.b32.xlu0 %v269, 16
    %v301 = vpop.permute.xlu0 %300
    %302 = vrot.lane.b32.xlu0 %v274, 16
    %v303 = vpop.permute.xlu0 %302
    %304 = vrot.lane.b32.xlu0 %v279, 16
    %v305 = vpop.permute.xlu0 %304
    %306 = vrot.lane.b32.xlu0 %v284, 16
    %v307 = vpop.permute.xlu0 %306
    %308 = vrot.lane.b32.xlu0 %v289, 16
    %v309 = vpop.permute.xlu0 %308
    %v316 = vsel %vm59, %v145, %v299
    %v317 = vsel %vm59, %v150, %v301
    %v318 = vsel %vm59, %v155, %v303
    %v319 = vsel %vm59, %v160, %v305
    %v320 = vsel %vm59, %v165, %v307
    %v321 = vsel %vm59, %v170, %v309
    %vm322 = vcmask 392192
    %v324 = vsel %vm322, %v53, 0
    %v327 = vsel %vm322, %v54, 0
    %v330 = vsel %vm322, %v55, 0
    %v333 = vsel %vm322, %v56, 0
    %v336 = vsel %vm322, %v57, 0
    %v339 = vsel %vm322, %v58, 0
    %341 = vmatprep.subr.mxu0 0.0
    %342 = vmatpush1.msra.mxu0 0.0
    %343 = vmatprep.subr.mxu0 0.0
    %344 = vmatpush1.msra.mxu0 0.0
    %345 = vmatprep.subr.mxu0 0.0
    %346 = vmatpush1.msra.mxu0 0.0
    %347 = vmatprep.subr.mxu0 0.0
    %348 = vmatpush1.msra.mxu0 0.0
    %349 = vmatprep.subr.mxu0 0.0
    %350 = vmatpush1.msra.mxu0 0.0
    %351 = vmatprep.subr.mxu0 0.0
    %352 = vmatpush1.msra.mxu0 0.0
    %353 = vmatprep.subr.mxu0 0.0
    %354 = vmatpush1.msra.mxu0 0.0
    %355 = vmatprep.subr.mxu0 0.0
    %356 = vmatpush1.msra.mxu0 0.0
    %357 = vmatprep.subr.mxu0 0.0
    %358 = vmatpush1.msra.mxu0 0.0
    %359 = vmatprep.subr.mxu0 0.0
    %360 = vmatpush1.msra.mxu0 0.0
    %361 = vmatprep.subr.mxu0 0.0
    %362 = vmatpush1.msra.mxu0 %v321
    %363 = vmatprep.subr.mxu0 0.0
    %364 = vmatpush1.msra.mxu0 %v320
    %365 = vmatprep.subr.mxu0 0.0
    %366 = vmatpush1.msra.mxu0 %v319
    %367 = vmatprep.subr.mxu0 0.0
    %368 = vmatpush1.msra.mxu0 %v318
    %369 = vmatprep.subr.mxu0 0.0
    %370 = vmatpush1.msra.mxu0 %v317
    %371 = vmatprep.subr.mxu0 0.0
    %372 = vmatpush1.msra.mxu0 %v316
    %373 = vmatprep.subr.mxu0 0.0
    %374 = vmatpush2.msra.mxu0 0.0
    %375 = vmatprep.subr.mxu0 0.0
    %376 = vmatpush2.msra.mxu0 0.0
    %377 = vmatprep.subr.mxu0 0.0
    %378 = vmatpush2.msra.mxu0 0.0
    %379 = vmatprep.subr.mxu0 0.0
    %380 = vmatpush2.msra.mxu0 0.0
    %381 = vmatprep.subr.mxu0 0.0
    %382 = vmatpush2.msra.mxu0 0.0
    %383 = vmatprep.subr.mxu0 0.0
    %384 = vmatpush2.msra.mxu0 0.0
    %385 = vmatprep.subr.mxu0 0.0
    %386 = vmatpush2.msra.mxu0 0.0
    %387 = vmatprep.subr.mxu0 0.0
    %388 = vmatpush2.msra.mxu0 0.0
    %389 = vmatprep.subr.mxu0 0.0
    %390 = vmatpush2.msra.mxu0 0.0
    %391 = vmatprep.subr.mxu0 0.0
    %392 = vmatpush2.msra.mxu0 0.0
    %393 = vmatprep.subr.mxu0 0.0
    %394 = vmatpush2.msra.mxu0 0.0
    %395 = vmatprep.subr.mxu0 0.0
    %396 = vmatpush2.msra.mxu0 0.0
    %397 = vmatprep.subr.mxu0 0.0
    %398 = vmatpush2.msra.mxu0 0.0
    %399 = vmatprep.subr.mxu0 0.0
    %400 = vmatpush2.msra.mxu0 0.0
    %401 = vmatprep.subr.mxu0 0.0
    %402 = vmatpush2.msra.mxu0 0.0
    %403 = vmatprep.subr.mxu0 0.0
    %404 = vmatpush2.msra.mxu0 0.0
    %405 = vmatprep.mubr.f32.mxu0 0.0
    %406 = vmatmul.mubr.f32.gmra.mxu0 %v324
    %v407 = vpop.f32.mrf.mxu0
    %v408 = vadd.f32 0.0, %v407
    %v409 = vpop.f32.mrf.mxu0
    %410 = vmatprep.mubr.f32.mxu0 0.0
    %411 = vmatmul.mubr.f32.gmra.mxu0 %v327
    %v412 = vpop.f32.mrf.mxu0
    %v413 = vadd.f32 0.0, %v412
    %v414 = vpop.f32.mrf.mxu0
    %415 = vmatprep.mubr.f32.mxu0 0.0
    %416 = vmatmul.mubr.f32.gmra.mxu0 %v330
    %v417 = vpop.f32.mrf.mxu0
    %v418 = vadd.f32 0.0, %v417
    %v419 = vpop.f32.mrf.mxu0
    %420 = vmatprep.mubr.f32.mxu0 0.0
    %421 = vmatmul.mubr.f32.gmra.mxu0 %v333
    %v422 = vpop.f32.mrf.mxu0
    %v423 = vadd.f32 0.0, %v422
    %v424 = vpop.f32.mrf.mxu0
    %425 = vmatprep.mubr.f32.mxu0 0.0
    %426 = vmatmul.mubr.f32.gmra.mxu0 %v336
    %v427 = vpop.f32.mrf.mxu0
    %v428 = vadd.f32 0.0, %v427
    %v429 = vpop.f32.mrf.mxu0
    %430 = vmatprep.mubr.f32.mxu0 0.0
    %431 = vmatmul.mubr.f32.gmra.mxu0 %v339
    %v432 = vpop.f32.mrf.mxu0
    %v433 = vadd.f32 0.0, %v432
    %v434 = vpop.f32.mrf.mxu0
    %435 = vdwg.mxu0
    %v436 = vld [vmem:[#allocation4] sm:$0xff]
    %v437 = vld [vmem:[#allocation4 + $0x8] sm:$0xff]
    %v438 = vld [vmem:[#allocation4 + $0x10] sm:$0xff]
    %v439 = vld [vmem:[#allocation4 + $0x18] sm:$0xff]
    %v440 = vld [vmem:[#allocation4 + $0x20] sm:$0xff]
    %v441 = vld [vmem:[#allocation4 + $0x28] sm:$0xff]
    %v442 = vmul.f32 %v408, %v436
    %v443 = vmul.f32 %v413, %v437
    %v444 = vmul.f32 %v418, %v438
    %v445 = vmul.f32 %v423, %v439
    %v446 = vmul.f32 %v428, %v440
    %v447 = vmul.f32 %v433, %v441
    %s448 = scalar_lea.vmem [#allocation4], 48
    %v449 = vld [vmem:[%s448] sm:$0xff]
    %v450 = vld [vmem:[%s448 + $0x8] sm:$0xff]
    %v451 = vld [vmem:[%s448 + $0x10] sm:$0xff]
    %v452 = vld [vmem:[%s448 + $0x18] sm:$0xff]
    %v453 = vld [vmem:[%s448 + $0x20] sm:$0xff]
    %v454 = vld [vmem:[%s448 + $0x28] sm:$0xff]
    %v455 = vadd.f32 %v442, %v449
    %v456 = vadd.f32 %v443, %v450
    %v457 = vadd.f32 %v444, %v451
    %v458 = vadd.f32 %v445, %v452
    %v459 = vadd.f32 %v446, %v453
    %v460 = vadd.f32 %v447, %v454
    %vm461 = vcmp.ge.f32.partialorder %v455, 0.0
    %vm462 = vcmp.ge.f32.partialorder %v456, 0.0
    %vm463 = vcmp.ge.f32.partialorder %v457, 0.0
    %vm464 = vcmp.ge.f32.partialorder %v458, 0.0
    %vm465 = vcmp.ge.f32.partialorder %v459, 0.0
    %vm466 = vcmp.ge.f32.partialorder %v460, 0.0
    %v467 = vmul.f32 %v455, 0.01
    %v468 = vmul.f32 %v456, 0.01
    %v469 = vmul.f32 %v457, 0.01
    %v470 = vmul.f32 %v458, 0.01
    %v471 = vmul.f32 %v459, 0.01
    %v472 = vmul.f32 %v460, 0.01
    %v473 = vsel %vm461, %v455, %v467
    %v474 = vsel %vm462, %v456, %v468
    %v475 = vsel %vm463, %v457, %v469
    %v476 = vsel %vm464, %v458, %v470
    %v477 = vsel %vm465, %v459, %v471
    %v478 = vsel %vm466, %v460, %v472
    %s479 = scalar_lea.vmem [#allocation2], 48
    %v480 = vld [vmem:[%s479] sm:$0xff]
    %v481 = vld [vmem:[%s479 + $0x8] sm:$0xff]
    %v482 = vld [vmem:[%s479 + $0x10] sm:$0xff]
    %v483 = vld [vmem:[%s479 + $0x18] sm:$0xff]
    %v484 = vld [vmem:[%s479 + $0x20] sm:$0xff]
    %v485 = vld [vmem:[%s479 + $0x28] sm:$0xff]
    %488 = vrot.lane.b32.xlu0 %v51, 112
    %v489 = vpop.permute.xlu0 %488
    %490 = vrot.lane.b32.xlu0 %v52, 112
    %v491 = vpop.permute.xlu0 %490
    %v495 = vsel %vm59, %v473, 0
    %v498 = vsel %vm59, %v474, 0
    %v501 = vsel %vm59, %v475, 0
    %v504 = vsel %vm59, %v476, 0
    %v507 = vsel %vm59, %v477, 0
    %v510 = vsel %vm59, %v478, 0
    %512 = vmatprep.subr.mxu0 0.0
    %513 = vmatpush1.msra.mxu0 0.0
    %514 = vmatprep.subr.mxu0 0.0
    %515 = vmatpush1.msra.mxu0 0.0
    %516 = vmatprep.subr.mxu0 0.0
    %517 = vmatpush1.msra.mxu0 0.0
    %518 = vmatprep.subr.mxu0 0.0
    %519 = vmatpush1.msra.mxu0 0.0
    %520 = vmatprep.subr.mxu0 0.0
    %521 = vmatpush1.msra.mxu0 0.0
    %522 = vmatprep.subr.mxu0 0.0
    %523 = vmatpush1.msra.mxu0 0.0
    %524 = vmatprep.subr.mxu0 0.0
    %525 = vmatpush1.msra.mxu0 0.0
    %526 = vmatprep.subr.mxu0 0.0
    %527 = vmatpush1.msra.mxu0 0.0
    %528 = vmatprep.subr.mxu0 0.0
    %529 = vmatpush1.msra.mxu0 0.0
    %530 = vmatprep.subr.mxu0 0.0
    %531 = vmatpush1.msra.mxu0 0.0
    %532 = vmatprep.subr.mxu0 0.0
    %533 = vmatpush1.msra.mxu0 0.0
    %534 = vmatprep.subr.mxu0 0.0
    %535 = vmatpush1.msra.mxu0 0.0
    %536 = vmatprep.subr.mxu0 0.0
    %537 = vmatpush1.msra.mxu0 0.0
    %538 = vmatprep.subr.mxu0 0.0
    %539 = vmatpush1.msra.mxu0 0.0
    %540 = vmatprep.subr.mxu0 0.0
    %541 = vmatpush1.msra.mxu0 %v491
    %542 = vmatprep.subr.mxu0 0.0
    %543 = vmatpush1.msra.mxu0 %v489
    %544 = vmatprep.subr.mxu0 0.0
    %545 = vmatpush2.msra.mxu0 0.0
    %546 = vmatprep.subr.mxu0 0.0
    %547 = vmatpush2.msra.mxu0 0.0
    %548 = vmatprep.subr.mxu0 0.0
    %549 = vmatpush2.msra.mxu0 0.0
    %550 = vmatprep.subr.mxu0 0.0
    %551 = vmatpush2.msra.mxu0 0.0
    %552 = vmatprep.subr.mxu0 0.0
    %553 = vmatpush2.msra.mxu0 0.0
    %554 = vmatprep.subr.mxu0 0.0
    %555 = vmatpush2.msra.mxu0 0.0
    %556 = vmatprep.subr.mxu0 0.0
    %557 = vmatpush2.msra.mxu0 0.0
    %558 = vmatprep.subr.mxu0 0.0
    %559 = vmatpush2.msra.mxu0 0.0
    %560 = vmatprep.subr.mxu0 0.0
    %561 = vmatpush2.msra.mxu0 0.0
    %562 = vmatprep.subr.mxu0 0.0
    %563 = vmatpush2.msra.mxu0 0.0
    %564 = vmatprep.subr.mxu0 0.0
    %565 = vmatpush2.msra.mxu0 0.0
    %566 = vmatprep.subr.mxu0 0.0
    %567 = vmatpush2.msra.mxu0 0.0
    %568 = vmatprep.subr.mxu0 0.0
    %569 = vmatpush2.msra.mxu0 0.0
    %570 = vmatprep.subr.mxu0 0.0
    %571 = vmatpush2.msra.mxu0 0.0
    %572 = vmatprep.subr.mxu0 0.0
    %573 = vmatpush2.msra.mxu0 0.0
    %574 = vmatprep.subr.mxu0 0.0
    %575 = vmatpush2.msra.mxu0 0.0
    %576 = vmatprep.mubr.f32.mxu0 0.0
    %577 = vmatmul.mubr.f32.gmra.mxu0 %v495
    %v578 = vpop.f32.mrf.mxu0
    %v579 = vadd.f32 0.0, %v578
    %v580 = vpop.f32.mrf.mxu0
    %581 = vmatprep.mubr.f32.mxu0 0.0
    %582 = vmatmul.mubr.f32.gmra.mxu0 %v498
    %v583 = vpop.f32.mrf.mxu0
    %v584 = vadd.f32 0.0, %v583
    %v585 = vpop.f32.mrf.mxu0
    %586 = vmatprep.mubr.f32.mxu0 0.0
    %587 = vmatmul.mubr.f32.gmra.mxu0 %v501
    %v588 = vpop.f32.mrf.mxu0
    %v589 = vadd.f32 0.0, %v588
    %v590 = vpop.f32.mrf.mxu0
    %591 = vmatprep.mubr.f32.mxu0 0.0
    %592 = vmatmul.mubr.f32.gmra.mxu0 %v504
    %v593 = vpop.f32.mrf.mxu0
    %v594 = vadd.f32 0.0, %v593
    %v595 = vpop.f32.mrf.mxu0
    %596 = vmatprep.mubr.f32.mxu0 0.0
    %597 = vmatmul.mubr.f32.gmra.mxu0 %v507
    %v598 = vpop.f32.mrf.mxu0
    %v599 = vadd.f32 0.0, %v598
    %v600 = vpop.f32.mrf.mxu0
    %601 = vmatprep.mubr.f32.mxu0 0.0
    %602 = vmatmul.mubr.f32.gmra.mxu0 %v510
    %v603 = vpop.f32.mrf.mxu0
    %v604 = vadd.f32 0.0, %v603
    %v605 = vpop.f32.mrf.mxu0
    %606 = vdwg.mxu0
    %607 = vrot.lane.b32.xlu0 %v473, 112
    %v608 = vpop.permute.xlu0 %607
    %609 = vrot.lane.b32.xlu0 %v474, 112
    %v610 = vpop.permute.xlu0 %609
    %611 = vrot.lane.b32.xlu0 %v475, 112
    %v612 = vpop.permute.xlu0 %611
    %613 = vrot.lane.b32.xlu0 %v476, 112
    %v614 = vpop.permute.xlu0 %613
    %615 = vrot.lane.b32.xlu0 %v477, 112
    %v616 = vpop.permute.xlu0 %615
    %617 = vrot.lane.b32.xlu0 %v478, 112
    %v618 = vpop.permute.xlu0 %617
    %v619 = vsel %vm59, %v608, 0
    %v621 = vsel %vm59, %v610, 0
    %v623 = vsel %vm59, %v612, 0
    %v625 = vsel %vm59, %v614, 0
    %v627 = vsel %vm59, %v616, 0
    %v629 = vsel %vm59, %v618, 0
    %631 = vmatprep.subr.mxu0 0.0
    %632 = vmatpush1.msra.mxu0 0.0
    %633 = vmatprep.subr.mxu0 0.0
    %634 = vmatpush1.msra.mxu0 0.0
    %635 = vmatprep.subr.mxu0 0.0
    %636 = vmatpush1.msra.mxu0 0.0
    %637 = vmatprep.subr.mxu0 0.0
    %638 = vmatpush1.msra.mxu0 0.0
    %639 = vmatprep.subr.mxu0 0.0
    %640 = vmatpush1.msra.mxu0 0.0
    %641 = vmatprep.subr.mxu0 0.0
    %642 = vmatpush1.msra.mxu0 0.0
    %643 = vmatprep.subr.mxu0 0.0
    %644 = vmatpush1.msra.mxu0 0.0
    %645 = vmatprep.subr.mxu0 0.0
    %646 = vmatpush1.msra.mxu0 0.0
    %647 = vmatprep.subr.mxu0 0.0
    %648 = vmatpush1.msra.mxu0 0.0
    %649 = vmatprep.subr.mxu0 0.0
    %650 = vmatpush1.msra.mxu0 0.0
    %651 = vmatprep.subr.mxu0 0.0
    %652 = vmatpush1.msra.mxu0 0.0
    %653 = vmatprep.subr.mxu0 0.0
    %654 = vmatpush1.msra.mxu0 0.0
    %655 = vmatprep.subr.mxu0 0.0
    %656 = vmatpush1.msra.mxu0 0.0
    %657 = vmatprep.subr.mxu0 0.0
    %658 = vmatpush1.msra.mxu0 0.0
    %659 = vmatprep.subr.mxu0 0.0
    %660 = vmatpush1.msra.mxu0 %v491
    %661 = vmatprep.subr.mxu0 0.0
    %662 = vmatpush1.msra.mxu0 %v489
    %663 = vmatprep.subr.mxu0 0.0
    %664 = vmatpush2.msra.mxu0 0.0
    %665 = vmatprep.subr.mxu0 0.0
    %666 = vmatpush2.msra.mxu0 0.0
    %667 = vmatprep.subr.mxu0 0.0
    %668 = vmatpush2.msra.mxu0 0.0
    %669 = vmatprep.subr.mxu0 0.0
    %670 = vmatpush2.msra.mxu0 0.0
    %671 = vmatprep.subr.mxu0 0.0
    %672 = vmatpush2.msra.mxu0 0.0
    %673 = vmatprep.subr.mxu0 0.0
    %674 = vmatpush2.msra.mxu0 0.0
    %675 = vmatprep.subr.mxu0 0.0
    %676 = vmatpush2.msra.mxu0 0.0
    %677 = vmatprep.subr.mxu0 0.0
    %678 = vmatpush2.msra.mxu0 0.0
    %679 = vmatprep.subr.mxu0 0.0
    %680 = vmatpush2.msra.mxu0 0.0
    %681 = vmatprep.subr.mxu0 0.0
    %682 = vmatpush2.msra.mxu0 0.0
    %683 = vmatprep.subr.mxu0 0.0
    %684 = vmatpush2.msra.mxu0 0.0
    %685 = vmatprep.subr.mxu0 0.0
    %686 = vmatpush2.msra.mxu0 0.0
    %687 = vmatprep.subr.mxu0 0.0
    %688 = vmatpush2.msra.mxu0 0.0
    %689 = vmatprep.subr.mxu0 0.0
    %690 = vmatpush2.msra.mxu0 0.0
    %691 = vmatprep.subr.mxu0 0.0
    %692 = vmatpush2.msra.mxu0 0.0
    %693 = vmatprep.subr.mxu0 0.0
    %694 = vmatpush2.msra.mxu0 0.0
    %695 = vmatprep.mubr.f32.mxu0 0.0
    %696 = vmatmul.mubr.f32.gmra.mxu0 %v619
    %v697 = vpop.f32.mrf.mxu0
    %v698 = vadd.f32 0.0, %v697
    %v699 = vpop.f32.mrf.mxu0
    %700 = vmatprep.mubr.f32.mxu0 0.0
    %701 = vmatmul.mubr.f32.gmra.mxu0 %v621
    %v702 = vpop.f32.mrf.mxu0
    %v703 = vadd.f32 0.0, %v702
    %v704 = vpop.f32.mrf.mxu0
    %705 = vmatprep.mubr.f32.mxu0 0.0
    %706 = vmatmul.mubr.f32.gmra.mxu0 %v623
    %v707 = vpop.f32.mrf.mxu0
    %v708 = vadd.f32 0.0, %v707
    %v709 = vpop.f32.mrf.mxu0
    %710 = vmatprep.mubr.f32.mxu0 0.0
    %711 = vmatmul.mubr.f32.gmra.mxu0 %v625
    %v712 = vpop.f32.mrf.mxu0
    %v713 = vadd.f32 0.0, %v712
    %v714 = vpop.f32.mrf.mxu0
    %715 = vmatprep.mubr.f32.mxu0 0.0
    %716 = vmatmul.mubr.f32.gmra.mxu0 %v627
    %v717 = vpop.f32.mrf.mxu0
    %v718 = vadd.f32 0.0, %v717
    %v719 = vpop.f32.mrf.mxu0
    %720 = vmatprep.mubr.f32.mxu0 0.0
    %721 = vmatmul.mubr.f32.gmra.mxu0 %v629
    %v722 = vpop.f32.mrf.mxu0
    %v723 = vadd.f32 0.0, %v722
    %v724 = vpop.f32.mrf.mxu0
    %725 = vdwg.mxu0
    %732 = vrot.lane.b32.xlu0 %v698, 16
    %v733 = vpop.permute.xlu0 %732
    %734 = vrot.lane.b32.xlu0 %v703, 16
    %v735 = vpop.permute.xlu0 %734
    %736 = vrot.lane.b32.xlu0 %v708, 16
    %v737 = vpop.permute.xlu0 %736
    %738 = vrot.lane.b32.xlu0 %v713, 16
    %v739 = vpop.permute.xlu0 %738
    %740 = vrot.lane.b32.xlu0 %v718, 16
    %v741 = vpop.permute.xlu0 %740
    %742 = vrot.lane.b32.xlu0 %v723, 16
    %v743 = vpop.permute.xlu0 %742
    %v750 = vsel %vm59, %v579, %v733
    %v751 = vsel %vm59, %v584, %v735
    %v752 = vsel %vm59, %v589, %v737
    %v753 = vsel %vm59, %v594, %v739
    %v754 = vsel %vm59, %v599, %v741
    %v755 = vsel %vm59, %v604, %v743
    %v757 = vsel %vm322, %v480, 0
    %v760 = vsel %vm322, %v481, 0
    %v763 = vsel %vm322, %v482, 0
    %v766 = vsel %vm322, %v483, 0
    %v769 = vsel %vm322, %v484, 0
    %v772 = vsel %vm322, %v485, 0
    %774 = vmatprep.subr.mxu0 0.0
    %775 = vmatpush1.msra.mxu0 0.0
    %776 = vmatprep.subr.mxu0 0.0
    %777 = vmatpush1.msra.mxu0 0.0
    %778 = vmatprep.subr.mxu0 0.0
    %779 = vmatpush1.msra.mxu0 0.0
    %780 = vmatprep.subr.mxu0 0.0
    %781 = vmatpush1.msra.mxu0 0.0
    %782 = vmatprep.subr.mxu0 0.0
    %783 = vmatpush1.msra.mxu0 0.0
    %784 = vmatprep.subr.mxu0 0.0
    %785 = vmatpush1.msra.mxu0 0.0
    %786 = vmatprep.subr.mxu0 0.0
    %787 = vmatpush1.msra.mxu0 0.0
    %788 = vmatprep.subr.mxu0 0.0
    %789 = vmatpush1.msra.mxu0 0.0
    %790 = vmatprep.subr.mxu0 0.0
    %791 = vmatpush1.msra.mxu0 0.0
    %792 = vmatprep.subr.mxu0 0.0
    %793 = vmatpush1.msra.mxu0 0.0
    %794 = vmatprep.subr.mxu0 0.0
    %795 = vmatpush1.msra.mxu0 %v755
    %796 = vmatprep.subr.mxu0 0.0
    %797 = vmatpush1.msra.mxu0 %v754
    %798 = vmatprep.subr.mxu0 0.0
    %799 = vmatpush1.msra.mxu0 %v753
    %800 = vmatprep.subr.mxu0 0.0
    %801 = vmatpush1.msra.mxu0 %v752
    %802 = vmatprep.subr.mxu0 0.0
    %803 = vmatpush1.msra.mxu0 %v751
    %804 = vmatprep.subr.mxu0 0.0
    %805 = vmatpush1.msra.mxu0 %v750
    %806 = vmatprep.subr.mxu0 0.0
    %807 = vmatpush2.msra.mxu0 0.0
    %808 = vmatprep.subr.mxu0 0.0
    %809 = vmatpush2.msra.mxu0 0.0
    %810 = vmatprep.subr.mxu0 0.0
    %811 = vmatpush2.msra.mxu0 0.0
    %812 = vmatprep.subr.mxu0 0.0
    %813 = vmatpush2.msra.mxu0 0.0
    %814 = vmatprep.subr.mxu0 0.0
    %815 = vmatpush2.msra.mxu0 0.0
    %816 = vmatprep.subr.mxu0 0.0
    %817 = vmatpush2.msra.mxu0 0.0
    %818 = vmatprep.subr.mxu0 0.0
    %819 = vmatpush2.msra.mxu0 0.0
    %820 = vmatprep.subr.mxu0 0.0
    %821 = vmatpush2.msra.mxu0 0.0
    %822 = vmatprep.subr.mxu0 0.0
    %823 = vmatpush2.msra.mxu0 0.0
    %824 = vmatprep.subr.mxu0 0.0
    %825 = vmatpush2.msra.mxu0 0.0
    %826 = vmatprep.subr.mxu0 0.0
    %827 = vmatpush2.msra.mxu0 0.0
    %828 = vmatprep.subr.mxu0 0.0
    %829 = vmatpush2.msra.mxu0 0.0
    %830 = vmatprep.subr.mxu0 0.0
    %831 = vmatpush2.msra.mxu0 0.0
    %832 = vmatprep.subr.mxu0 0.0
    %833 = vmatpush2.msra.mxu0 0.0
    %834 = vmatprep.subr.mxu0 0.0
    %835 = vmatpush2.msra.mxu0 0.0
    %836 = vmatprep.subr.mxu0 0.0
    %837 = vmatpush2.msra.mxu0 0.0
    %838 = vmatprep.mubr.f32.mxu0 0.0
    %839 = vmatmul.mubr.f32.gmra.mxu0 %v757
    %v840 = vpop.f32.mrf.mxu0
    %v841 = vadd.f32 0.0, %v840
    %v842 = vpop.f32.mrf.mxu0
    %843 = vmatprep.mubr.f32.mxu0 0.0
    %844 = vmatmul.mubr.f32.gmra.mxu0 %v760
    %v845 = vpop.f32.mrf.mxu0
    %v846 = vadd.f32 0.0, %v845
    %v847 = vpop.f32.mrf.mxu0
    %848 = vmatprep.mubr.f32.mxu0 0.0
    %849 = vmatmul.mubr.f32.gmra.mxu0 %v763
    %v850 = vpop.f32.mrf.mxu0
    %v851 = vadd.f32 0.0, %v850
    %v852 = vpop.f32.mrf.mxu0
    %853 = vmatprep.mubr.f32.mxu0 0.0
    %854 = vmatmul.mubr.f32.gmra.mxu0 %v766
    %v855 = vpop.f32.mrf.mxu0
    %v856 = vadd.f32 0.0, %v855
    %v857 = vpop.f32.mrf.mxu0
    %858 = vmatprep.mubr.f32.mxu0 0.0
    %859 = vmatmul.mubr.f32.gmra.mxu0 %v769
    %v860 = vpop.f32.mrf.mxu0
    %v861 = vadd.f32 0.0, %v860
    %v862 = vpop.f32.mrf.mxu0
    %863 = vmatprep.mubr.f32.mxu0 0.0
    %864 = vmatmul.mubr.f32.gmra.mxu0 %v772
    %v865 = vpop.f32.mrf.mxu0
    %v866 = vadd.f32 0.0, %v865
    %v867 = vpop.f32.mrf.mxu0
    %868 = vdwg.mxu0
    %875 = vrot.lane.b32.xlu0 %v436, 96
    %v876 = vpop.permute.xlu0 %875
    %877 = vrot.lane.b32.xlu0 %v437, 96
    %v878 = vpop.permute.xlu0 %877
    %879 = vrot.lane.b32.xlu0 %v438, 96
    %v880 = vpop.permute.xlu0 %879
    %881 = vrot.lane.b32.xlu0 %v439, 96
    %v882 = vpop.permute.xlu0 %881
    %883 = vrot.lane.b32.xlu0 %v440, 96
    %v884 = vpop.permute.xlu0 %883
    %885 = vrot.lane.b32.xlu0 %v441, 96
    %v886 = vpop.permute.xlu0 %885
    %v893 = vmul.f32 %v841, %v876
    %v894 = vmul.f32 %v846, %v878
    %v895 = vmul.f32 %v851, %v880
    %v896 = vmul.f32 %v856, %v882
    %v897 = vmul.f32 %v861, %v884
    %v898 = vmul.f32 %v866, %v886
    %905 = vrot.lane.b32.xlu0 %v449, 96
    %v906 = vpop.permute.xlu0 %905
    %907 = vrot.lane.b32.xlu0 %v450, 96
    %v908 = vpop.permute.xlu0 %907
    %909 = vrot.lane.b32.xlu0 %v451, 96
    %v910 = vpop.permute.xlu0 %909
    %911 = vrot.lane.b32.xlu0 %v452, 96
    %v912 = vpop.permute.xlu0 %911
    %913 = vrot.lane.b32.xlu0 %v453, 96
    %v914 = vpop.permute.xlu0 %913
    %915 = vrot.lane.b32.xlu0 %v454, 96
    %v916 = vpop.permute.xlu0 %915
    %v923 = vadd.f32 %v893, %v906
    %v924 = vadd.f32 %v894, %v908
    %v925 = vadd.f32 %v895, %v910
    %v926 = vadd.f32 %v896, %v912
    %v927 = vadd.f32 %v897, %v914
    %v928 = vadd.f32 %v898, %v916
    %vm929 = vcmp.ge.f32.partialorder %v923, 0.0
    %vm930 = vcmp.ge.f32.partialorder %v924, 0.0
    %vm931 = vcmp.ge.f32.partialorder %v925, 0.0
    %vm932 = vcmp.ge.f32.partialorder %v926, 0.0
    %vm933 = vcmp.ge.f32.partialorder %v927, 0.0
    %vm934 = vcmp.ge.f32.partialorder %v928, 0.0
    %v935 = vmul.f32 %v923, 0.01
    %v936 = vmul.f32 %v924, 0.01
    %v937 = vmul.f32 %v925, 0.01
    %v938 = vmul.f32 %v926, 0.01
    %v939 = vmul.f32 %v927, 0.01
    %v940 = vmul.f32 %v928, 0.01
    %v941 = vsel %vm929, %v923, %v935
    %v942 = vsel %vm930, %v924, %v936
    %v943 = vsel %vm931, %v925, %v937
    %v944 = vsel %vm932, %v926, %v938
    %v945 = vsel %vm933, %v927, %v939
    %v946 = vsel %vm934, %v928, %v940
    %vm947 = vcmask 261120
    %948 = vst.msk [vmem:[%s4] sm:$0xff] %vm947, %v941
    %949 = vst.msk [vmem:[%s4 + $0x8] sm:$0xff] %vm947, %v942
    %950 = vst.msk [vmem:[%s4 + $0x10] sm:$0xff] %vm947, %v943
    %951 = vst.msk [vmem:[%s4 + $0x18] sm:$0xff] %vm947, %v944
    %952 = vst.msk [vmem:[%s4 + $0x20] sm:$0xff] %vm947, %v945
    %953 = vst.msk [vmem:[%s4 + $0x28] sm:$0xff] %vm947, %v946
    // Predicated region
    $region26: #{gc_block_nores.1} parent=1 // pred_check
      _
    $region27: #{gc_block_nores.1} parent=1 // pred_check_branch
      %955 = sbr.rel (0) target = $region29
    $region28: #{gc_block_nores.1} parent=1 // pred_region
      _
    $region29: #{gc_block_nores.1} parent=1 // pred_fallthru
      _
    // Predicated region
    $region30: #{gc_block_nores.1} parent=1 // pred_check
      _
    $region31: #{gc_block_nores.1} parent=1 // pred_check_branch
      %957 = sbr.rel (0) target = $region33
    $region32: #{gc_block_nores.1} parent=1 // pred_region
      _
    $region33: #{gc_block_nores.1} parent=1 // pred_fallthru
      _
    %958 = vsyncpa [#allocation3], 1
    %959 = vsyncpa [#allocation5], 1

</llo_original>
